<compile_context>
chip_gen: v7x
topology: tpu7x:2x2x1
jax: 0.10.0
libtpu: 0.0.40
codegen_flags: <defaults>
</compile_context>

<pallas_src>
import functools

import jax
import jax.numpy as jnp
from jax import lax
from jax.experimental import pallas as pl
from jax.experimental.pallas import tpu as pltpu


_UNROLLED_MAX_CLASSES = 32   # fully unroll the class loops up to this many planes
_FORI_UNROLL = 2             # manual unroll factor inside the fori_loop body


def _foreach_class(num_classes, unrolled, step, init):
    """Fold `carry = step(c, carry)` over c in [0, num_classes)."""
    if unrolled:
        carry = init
        for c in range(num_classes):
            carry = step(c, carry)
        return carry

    main = (num_classes // _FORI_UNROLL) * _FORI_UNROLL

    def body(i, carry):
        for u in range(_FORI_UNROLL):
            carry = step(i * _FORI_UNROLL + u, carry)
        return carry

    carry = lax.fori_loop(0, main // _FORI_UNROLL, body, init)
    for c in range(main, num_classes):           # static remainder
        carry = step(c, carry)
    return carry


def _ohem_ce_kernel(x_ref, t_ref, out_ref, *, num_classes, k, ignore_index,
                    topk_branch, pass1_native, unrolled):
    # x_ref:   (C, TH, W)   logits block in native dtype (batch dim squeezed)
    # t_ref:   (TH, W)      int32 class indices (ignore_index marks ignored pixels)
    # out_ref: (1, 128)     f32 lane-dense partial sum for this (batch, h-tile)
    tgt = t_ref[...]
    th_, w_ = tgt.shape
    p1_dtype = x_ref.dtype if pass1_native else jnp.float32

    # ---- pass 1: running max over classes + fused target-logit pick (select) -------
    def p1(c, carry):
        m, picked = carry
        xc = x_ref[c].astype(p1_dtype)
        return jnp.maximum(m, xc), jnp.where(tgt == c, xc, picked)

    m, picked = _foreach_class(
        num_classes, unrolled, p1,
        (jnp.full((th_, w_), -jnp.inf, p1_dtype),
         jnp.zeros((th_, w_), p1_dtype)))
    m = m.astype(jnp.float32)
    picked = picked.astype(jnp.float32)

    # ---- pass 2: exp-sum in f32 (EUP path) ------------------------------------------
    def p2(c, s):
        return s + jnp.exp(x_ref[c].astype(jnp.float32) - m)

    s = _foreach_class(num_classes, unrolled, p2,
                       jnp.zeros((th_, w_), jnp.float32))

    loss = m + jnp.log(s) - picked                       # per-pixel cross entropy (f32)
    loss = jnp.where(tgt != ignore_index, loss, 0.0)     # reduction='none' + ignore_index

    if topk_branch:
        # Exact sum of the top-k losses along W per row: each of the k (tiny) iterations
        # takes the exact f32 row-max and retires exactly one winning lane (lowest lane
        # index among ties; equal values give an identical sum to torch.topk).
        lane = lax.broadcasted_iota(jnp.int32, (th_, w_), 1)
        work = loss
        acc = jnp.zeros((th_, 1), jnp.float32)
        for _ in range(k):
            cur = jnp.max(work, axis=-1, keepdims=True)                 # exact value
            is_max = work == cur
            first = jnp.min(jnp.where(is_max, lane, w_), axis=-1, keepdims=True)
            acc = acc + cur
            work = jnp.where(is_max & (lane == first), -jnp.inf, work)  # retire one lane
        part = jnp.sum(acc)
    else:
        part = jnp.sum(loss)

    out_ref[...] = jnp.full(out_ref.shape, part, jnp.float32)


def _pick_tile_h(hp, n, c, w, itemsize, sub, budget_bytes=6 << 20, min_steps=8):
    """Largest H-tile that is a multiple of the sublane packing `sub`, divides the padded
    H, keeps the logits block under `budget_bytes`, and (if possible) leaves the (n, h/TH)
    grid with at least `min_steps` steps for 2-TC load balance / pipeline depth."""
    cands = [th for th in range(sub, hp + 1, sub) if hp % th == 0]
    fitting = [th for th in cands if th * c * w * itemsize <= budget_bytes] or [sub]
    for th in sorted(fitting, reverse=True):
        if n * (hp // th) >= min_steps:
            return th
    return min(fitting)


def _has_bf16_vpu():
    """v6e / v7x have bf16 VALU lanes; v4 / v5 do not."""
    try:
        kind = jax.devices()[0].device_kind.lower()
    except Exception:
        return False
    return ("v6" in kind) or ("v7" in kind)


def ohem_cross_entropy_2d(logits_nchw, target, *, thresh=0.6, ignore_index=255,
                          tile_h=None):
    """Forward pass of OhemCrossEntropy2d. Returns a scalar float32."""
    n, c, h, w = logits_nchw.shape
    t = target.astype(jnp.int32)

    topk_branch = thresh != 1
    k = int(thresh * n) if topk_branch else 0
    if topk_branch:
        if k <= 0:
            raise ValueError(f"int(thresh * n) = {k}: torch.topk(..., 0).mean() is NaN; "
                             "use a larger thresh or batch size")
        if k > w:
            raise ValueError(f"top-k size k={k} exceeds width {w} (torch.topk would raise)")

    itemsize = jnp.dtype(logits_nchw.dtype).itemsize
    sub = 8 * max(1, 4 // itemsize)     # sublane packing: 8 f32, 16 bf16, 32 int8/fp8

    # Pad H with ignore_index rows so it tiles cleanly; padded rows contribute 0 to the
    # numerator of both branches while denominators below use the original h.
    h_pad = (-h) % sub
    if h_pad:
        logits_nchw = jnp.pad(logits_nchw, ((0, 0), (0, 0), (0, h_pad), (0, 0)))
        t = jnp.pad(t, ((0, 0), (0, h_pad), (0, 0)), constant_values=ignore_index)
    hp = h + h_pad

    if tile_h is None:
        tile_h = _pick_tile_h(hp, n, c, w, itemsize, sub)
    assert hp % tile_h == 0 and tile_h % 8 == 0, (hp, tile_h)
    nh = hp // tile_h

    unrolled = c <= _UNROLLED_MAX_CLASSES
    pass1_native = (logits_nchw.dtype == jnp.bfloat16) and _has_bf16_vpu()

    kernel = functools.partial(
        _ohem_ce_kernel, num_classes=c, k=k, ignore_index=ignore_index,
        topk_branch=topk_branch, pass1_native=pass1_native, unrolled=unrolled)

    logits_block_bytes = c * tile_h * w * itemsize
    target_block_bytes = tile_h * w * 4
    # Double-buffered inputs + headroom; never below the smallest default scoped VMEM.
    vmem_limit = int(min(max(2 * (logits_block_bytes + target_block_bytes) + (2 << 20),
                             16 << 20), 128 << 20))

    partials = pl.pallas_call(
        kernel,
        out_shape=jax.ShapeDtypeStruct((n, nh, 1, 128), jnp.float32),
        grid_spec=pltpu.PrefetchScalarGridSpec(
            num_scalar_prefetch=0,
            grid=(n, nh),
            in_specs=[
                pl.BlockSpec((None, c, tile_h, w), lambda i, j: (i, 0, j, 0)),
                pl.BlockSpec((None, tile_h, w), lambda i, j: (i, j, 0)),
            ],
            out_specs=pl.BlockSpec((None, None, 1, 128), lambda i, j: (i, j, 0, 0)),
        ),
        compiler_params=pltpu.CompilerParams(
            dimension_semantics=("parallel", "parallel"),
            vmem_limit_bytes=vmem_limit),
    )(logits_nchw, t)

    total = jnp.sum(partials[:, :, 0, 0])
    denom = (n * h * k) if topk_branch else (n * h * w)
    return total / jnp.float32(denom)


def _reference(logits_nchw, target, *, thresh=0.6, ignore_index=255):
    """Pure-JAX reference mirroring the PyTorch module."""
    n, c, h, w = logits_nchw.shape
    x = logits_nchw.astype(jnp.float32)
    logz = jax.nn.log_softmax(x, axis=1)                              # (n,c,h,w)
    tgt = target.astype(jnp.int32)
    safe_tgt = jnp.where(tgt == ignore_index, 0, tgt)
    picked = jnp.take_along_axis(logz, safe_tgt[:, None, :, :], axis=1)[:, 0]
    loss = jnp.where(tgt == ignore_index, 0.0, -picked)               # (n,h,w)
    if thresh == 1:
        return jnp.mean(loss)
    k = int(thresh * n)
    vals, _ = lax.top_k(loss, k)                                      # along last axis (w)
    return jnp.mean(vals)


if __name__ == "__main__":
    key = jax.random.PRNGKey(0)
    keys = jax.random.split(key, 12)

    # --- Test 1: base shapes, top-k branch (k = int(0.6*2) = 1), explicit H tiling -------
    N, C, H, W = 2, 4, 16, 16
    logits = jax.random.normal(keys[0], (N, C, H, W), dtype=jnp.float32)
    target = jax.random.randint(keys[1], (N, H, W), 0, C, dtype=jnp.int32)
    target = jnp.where(jax.random.bernoulli(keys[2], 0.1, (N, H, W)), 255, target)

    out = jax.block_until_ready(ohem_cross_entropy_2d(logits, target, thresh=0.6, tile_h=8))
    ref = jax.block_until_ready(_reference(logits, target, thresh=0.6))
    assert jnp.allclose(out, ref, rtol=1e-5, atol=1e-5), (out, ref)

    # --- Test 1b: thresh == 1 branch (plain mean), auto H tiling ------------------------
    out_mean = jax.block_until_ready(ohem_cross_entropy_2d(logits, target, thresh=1))
    ref_mean = jax.block_until_ready(_reference(logits, target, thresh=1))
    assert jnp.allclose(out_mean, ref_mean, rtol=1e-5, atol=1e-5), (out_mean, ref_mean)

    # --- Test 2: odd H (padded internally with ignore rows), k = int(0.7*4) = 2 ---------
    N2, C2, H2, W2 = 4, 5, 12, 24
    logits2 = jax.random.normal(keys[3], (N2, C2, H2, W2), dtype=jnp.float32)
    target2 = jax.random.randint(keys[4], (N2, H2, W2), 0, C2, dtype=jnp.int32)
    target2 = jnp.where(jax.random.bernoulli(keys[5], 0.15, (N2, H2, W2)), 255, target2)

    out2 = jax.block_until_ready(ohem_cross_entropy_2d(logits2, target2, thresh=0.7))
    ref2 = jax.block_until_ready(_reference(logits2, target2, thresh=0.7))
    assert jnp.allclose(out2, ref2, rtol=1e-5, atol=1e-5), (out2, ref2)

    # --- Test 3: bf16 logits (native bf16 pass-1 on v6e/v7x, f32 exp path) --------------
    logits3 = jax.random.normal(keys[6], (N, C, H, W), dtype=jnp.float32).astype(jnp.bfloat16)
    target3 = jax.random.randint(keys[7], (N, H, W), 0, C, dtype=jnp.int32)
    target3 = jnp.where(jax.random.bernoulli(keys[8], 0.1, (N, H, W)), 255, target3)

    out3 = jax.block_until_ready(ohem_cross_entropy_2d(logits3, target3, thresh=0.5))
    ref3 = jax.block_until_ready(_reference(logits3, target3, thresh=0.5))
    assert jnp.allclose(out3, ref3, rtol=1e-5, atol=1e-5), (out3, ref3)

    # --- Test 4: many classes (exercises the fori_loop class-loop path, C > 32) ---------
    N4, C4, H4, W4 = 2, 40, 8, 128
    logits4 = jax.random.normal(keys[9], (N4, C4, H4, W4), dtype=jnp.float32)
    target4 = jax.random.randint(keys[10], (N4, H4, W4), 0, C4, dtype=jnp.int32)
    target4 = jnp.where(jax.random.bernoulli(keys[11], 0.1, (N4, H4, W4)), 255, target4)

    out4 = jax.block_until_ready(ohem_cross_entropy_2d(logits4, target4, thresh=0.6))
    ref4 = jax.block_until_ready(_reference(logits4, target4, thresh=0.6))
    assert jnp.allclose(out4, ref4, rtol=1e-5, atol=1e-5), (out4, ref4)

    print("KERNEL_OK")
</pallas_src>

<mosaic_0001>
module attributes {stable_mosaic.version = 11 : i64} {
  func.func @_ohem_ce_kernel(%arg0: i32, %arg1: i32, %arg2: memref<1x4x8x16xf32, #tpu.memory_space<vmem>>, %arg3: memref<1x8x16xi32, #tpu.memory_space<vmem>>, %arg4: memref<1x1x1x128xf32, #tpu.memory_space<vmem>>) attributes {dimension_semantics = [#tpu.dimension_semantics<parallel>, #tpu.dimension_semantics<parallel>], iteration_bounds = array<i64: 2, 2>, scalar_prefetch = 0 : i64, scratch_operands = 0 : i64, tpu.core_type = #tpu.core_type<tc>, window_params = [{transform_indices = @transform_0, window_bounds = array<i64: 1, 4, 8, 16>}, {transform_indices = @transform_1, window_bounds = array<i64: 1, 8, 16>}, {transform_indices = @transform_2, window_bounds = array<i64: 1, 1, 1, 128>}]} {
    %c0 = arith.constant 0 : index
    %c0_0 = arith.constant 0 : index
    %c0_1 = arith.constant 0 : index
    %0 = vector.load %arg3[%c0, %c0_0, %c0_1] : memref<1x8x16xi32, #tpu.memory_space<vmem>>, vector<1x8x16xi32>
    %1 = vector.shape_cast %0 : vector<1x8x16xi32> to vector<8x16xi32>
    %cst = arith.constant 0xFF800000 : f32
    %2 = vector.broadcast %cst : f32 to vector<8x16xf32>
    %cst_2 = arith.constant 0.000000e+00 : f32
    %3 = vector.broadcast %cst_2 : f32 to vector<8x16xf32>
    %c0_3 = arith.constant 0 : index
    %c0_4 = arith.constant 0 : index
    %c0_5 = arith.constant 0 : index
    %c0_6 = arith.constant 0 : index
    %4 = vector.load %arg2[%c0_3, %c0_4, %c0_5, %c0_6] : memref<1x4x8x16xf32, #tpu.memory_space<vmem>>, vector<1x1x8x16xf32>
    %5 = vector.shape_cast %4 : vector<1x1x8x16xf32> to vector<8x16xf32>
    %6 = arith.maximumf %2, %5 : vector<8x16xf32>
    %c0_i32 = arith.constant 0 : i32
    %7 = vector.broadcast %c0_i32 : i32 to vector<8x16xi32>
    %8 = arith.cmpi eq, %1, %7 : vector<8x16xi32>
    %9 = arith.select %8, %5, %3 : vector<8x16xi1>, vector<8x16xf32>
    %c0_7 = arith.constant 0 : index
    %c1 = arith.constant 1 : index
    %c0_8 = arith.constant 0 : index
    %c0_9 = arith.constant 0 : index
    %10 = vector.load %arg2[%c0_7, %c1, %c0_8, %c0_9] : memref<1x4x8x16xf32, #tpu.memory_space<vmem>>, vector<1x1x8x16xf32>
    %11 = vector.shape_cast %10 : vector<1x1x8x16xf32> to vector<8x16xf32>
    %12 = arith.maximumf %6, %11 : vector<8x16xf32>
    %c1_i32 = arith.constant 1 : i32
    %13 = vector.broadcast %c1_i32 : i32 to vector<8x16xi32>
    %14 = arith.cmpi eq, %1, %13 : vector<8x16xi32>
    %15 = arith.select %14, %11, %9 : vector<8x16xi1>, vector<8x16xf32>
    %c0_10 = arith.constant 0 : index
    %c2 = arith.constant 2 : index
    %c0_11 = arith.constant 0 : index
    %c0_12 = arith.constant 0 : index
    %16 = vector.load %arg2[%c0_10, %c2, %c0_11, %c0_12] : memref<1x4x8x16xf32, #tpu.memory_space<vmem>>, vector<1x1x8x16xf32>
    %17 = vector.shape_cast %16 : vector<1x1x8x16xf32> to vector<8x16xf32>
    %18 = arith.maximumf %12, %17 : vector<8x16xf32>
    %c2_i32 = arith.constant 2 : i32
    %19 = vector.broadcast %c2_i32 : i32 to vector<8x16xi32>
    %20 = arith.cmpi eq, %1, %19 : vector<8x16xi32>
    %21 = arith.select %20, %17, %15 : vector<8x16xi1>, vector<8x16xf32>
    %c0_13 = arith.constant 0 : index
    %c3 = arith.constant 3 : index
    %c0_14 = arith.constant 0 : index
    %c0_15 = arith.constant 0 : index
    %22 = vector.load %arg2[%c0_13, %c3, %c0_14, %c0_15] : memref<1x4x8x16xf32, #tpu.memory_space<vmem>>, vector<1x1x8x16xf32>
    %23 = vector.shape_cast %22 : vector<1x1x8x16xf32> to vector<8x16xf32>
    %24 = arith.maximumf %18, %23 : vector<8x16xf32>
    %c3_i32 = arith.constant 3 : i32
    %25 = vector.broadcast %c3_i32 : i32 to vector<8x16xi32>
    %26 = arith.cmpi eq, %1, %25 : vector<8x16xi32>
    %27 = arith.select %26, %23, %21 : vector<8x16xi1>, vector<8x16xf32>
    %cst_16 = arith.constant 0.000000e+00 : f32
    %28 = vector.broadcast %cst_16 : f32 to vector<8x16xf32>
    %c0_17 = arith.constant 0 : index
    %c0_18 = arith.constant 0 : index
    %c0_19 = arith.constant 0 : index
    %c0_20 = arith.constant 0 : index
    %29 = vector.load %arg2[%c0_17, %c0_18, %c0_19, %c0_20] : memref<1x4x8x16xf32, #tpu.memory_space<vmem>>, vector<1x1x8x16xf32>
    %30 = vector.shape_cast %29 : vector<1x1x8x16xf32> to vector<8x16xf32>
    %31 = arith.subf %30, %24 : vector<8x16xf32>
    %32 = math.exp %31 : vector<8x16xf32>
    %33 = arith.addf %28, %32 : vector<8x16xf32>
    %c0_21 = arith.constant 0 : index
    %c1_22 = arith.constant 1 : index
    %c0_23 = arith.constant 0 : index
    %c0_24 = arith.constant 0 : index
    %34 = vector.load %arg2[%c0_21, %c1_22, %c0_23, %c0_24] : memref<1x4x8x16xf32, #tpu.memory_space<vmem>>, vector<1x1x8x16xf32>
    %35 = vector.shape_cast %34 : vector<1x1x8x16xf32> to vector<8x16xf32>
    %36 = arith.subf %35, %24 : vector<8x16xf32>
    %37 = math.exp %36 : vector<8x16xf32>
    %38 = arith.addf %33, %37 : vector<8x16xf32>
    %c0_25 = arith.constant 0 : index
    %c2_26 = arith.constant 2 : index
    %c0_27 = arith.constant 0 : index
    %c0_28 = arith.constant 0 : index
    %39 = vector.load %arg2[%c0_25, %c2_26, %c0_27, %c0_28] : memref<1x4x8x16xf32, #tpu.memory_space<vmem>>, vector<1x1x8x16xf32>
    %40 = vector.shape_cast %39 : vector<1x1x8x16xf32> to vector<8x16xf32>
    %41 = arith.subf %40, %24 : vector<8x16xf32>
    %42 = math.exp %41 : vector<8x16xf32>
    %43 = arith.addf %38, %42 : vector<8x16xf32>
    %c0_29 = arith.constant 0 : index
    %c3_30 = arith.constant 3 : index
    %c0_31 = arith.constant 0 : index
    %c0_32 = arith.constant 0 : index
    %44 = vector.load %arg2[%c0_29, %c3_30, %c0_31, %c0_32] : memref<1x4x8x16xf32, #tpu.memory_space<vmem>>, vector<1x1x8x16xf32>
    %45 = vector.shape_cast %44 : vector<1x1x8x16xf32> to vector<8x16xf32>
    %46 = arith.subf %45, %24 : vector<8x16xf32>
    %47 = math.exp %46 : vector<8x16xf32>
    %48 = arith.addf %43, %47 : vector<8x16xf32>
    %49 = math.log %48 : vector<8x16xf32>
    %50 = arith.addf %24, %49 : vector<8x16xf32>
    %51 = arith.subf %50, %27 : vector<8x16xf32>
    %c255_i32 = arith.constant 255 : i32
    %52 = vector.broadcast %c255_i32 : i32 to vector<8x16xi32>
    %53 = arith.cmpi ne, %1, %52 : vector<8x16xi32>
    %cst_33 = arith.constant 0.000000e+00 : f32
    %54 = vector.broadcast %cst_33 : f32 to vector<8x16xf32>
    %55 = arith.select %53, %51, %54 : vector<8x16xi1>, vector<8x16xf32>
    %cst_34 = arith.constant 0.000000e+00 : f32
    %56 = vector.broadcast %cst_34 : f32 to vector<8x1xf32>
    %cst_35 = arith.constant dense<0xFF800000> : vector<8xf32>
    %57 = vector.multi_reduction <maximumf>, %55, %cst_35 [1] : vector<8x16xf32> to vector<8xf32>
    %58 = vector.shape_cast %57 : vector<8xf32> to vector<8x1xf32>
    %59 = arith.addf %56, %58 : vector<8x1xf32>
    %60 = vector.shape_cast %59 : vector<8x1xf32> to vector<1x8x1xf32>
    %cst_36 = arith.constant dense<0.000000e+00> : vector<1xf32>
    %61 = vector.multi_reduction <add>, %60, %cst_36 [1, 2] : vector<1x8x1xf32> to vector<1xf32>
    %62 = vector.shape_cast %61 : vector<1xf32> to vector<1x1x1xf32>
    %63 = vector.extract %62[0, 0, 0] : f32 from vector<1x1x1xf32>
    %64 = vector.broadcast %63 : f32 to vector<1x128xf32>
    %c0_37 = arith.constant 0 : index
    %c0_38 = arith.constant 0 : index
    %c0_39 = arith.constant 0 : index
    %c0_40 = arith.constant 0 : index
    %65 = vector.load %arg4[%c0_37, %c0_38, %c0_39, %c0_40] : memref<1x1x1x128xf32, #tpu.memory_space<vmem>>, vector<1x1x1x128xf32>
    %66 = vector.shape_cast %65 : vector<1x1x1x128xf32> to vector<1x128xf32>
    %67 = vector.shape_cast %64 : vector<1x128xf32> to vector<1x1x1x128xf32>
    tpu.vector_store %arg4[%c0_37, %c0_38, %c0_39, %c0_40], %67 {strides = array<i32>} : memref<1x1x1x128xf32, #tpu.memory_space<vmem>>, vector<1x1x1x128xf32>,
    return
  }
  func.func @transform_0(%arg0: i32, %arg1: i32) -> (i32, i32, i32, i32) {
    %c0_i32 = arith.constant 0 : i32
    %c0_i32_0 = arith.constant 0 : i32
    %c0_i32_1 = arith.constant 0 : i32
    return %arg0, %c0_i32, %arg1, %c0_i32_0 : i32, i32, i32, i32
  }
  func.func @transform_1(%arg0: i32, %arg1: i32) -> (i32, i32, i32) {
    %c0_i32 = arith.constant 0 : i32
    %c0_i32_0 = arith.constant 0 : i32
    return %arg0, %arg1, %c0_i32 : i32, i32, i32
  }
  func.func @transform_2(%arg0: i32, %arg1: i32) -> (i32, i32, i32, i32) {
    %c0_i32 = arith.constant 0 : i32
    %c0_i32_0 = arith.constant 0 : i32
    %c0_i32_1 = arith.constant 0 : i32
    return %arg0, %arg1, %c0_i32, %c0_i32_0 : i32, i32, i32, i32
  }
}

</mosaic_0001>

<llo_original>
// kernel: tpu_custom_call.1
$region0: #{tpu_custom_call.1}
  #allocation0 [shape = 'u32[]', space=smem, size = 0x4, offset = 0x4, fixed_abs, tag = 'smem constant byte address 0x4 - core index']
  #allocation1 [shape = 'u32[144,128]{1,0:T(1,128)}', space=vmem, size = 0x12000, scoped, tag = 'internal scratch']
  %s0 = inlined_call_operand.hbm [shape: f32[2,4,16,16], index: 0, kind: input, shape index: {}]
  %s1 = inlined_call_operand.hbm [shape: s32[2,16,16], index: 1, kind: input, shape index: {}]
  %s2 = inlined_call_operand.hbm [shape: f32[2,2,1,128], index: 2, kind: output, shape index: {}]
  %s3 = sld [smem:[#allocation0]]
  $region49: #{tpu_custom_call.1} parent=0
    _
  %s5 = ssub.s32 1, %s3
  %s6 = scalar_select 0, %s5, %s3
  $region1: #{tpu_custom_call.1} parent=0
    #allocation2 [shape = 'u8[32768]{0}', space=vmem, size = 0x8000, scoped, tag = 'input window, operand 0']
    #allocation3 [shape = 's32[2]{0}', space=sflag, size = 0x8, scoped, tag = 'scoped memory for tpu_custom_call.1']
    #allocation4 [shape = 's32[2]{0}', space=sflag, size = 0x8, scoped, tag = 'scoped memory for tpu_custom_call.1']
    #allocation5 [shape = 'u8[8192]{0}', space=vmem, size = 0x2000, scoped, tag = 'input window, operand 1']
    #allocation6 [shape = 's32[2]{0}', space=sflag, size = 0x8, scoped, tag = 'scoped memory for tpu_custom_call.1']
    #allocation7 [shape = 'u8[1024]{0}', space=vmem, size = 0x400, scoped, tag = 'output window, operand 0']
    %7 = vsyncpa [#allocation3], 0
    %s8 = scalar_lea.sflag [#allocation3], 1
    %9 = vsyncpa %s8, 0
    %10 = vsyncpa [#allocation6], 0
    %s11 = scalar_lea.sflag [#allocation6], 1
    %12 = vsyncpa %s11, 0
    %13 = vsyncpa [#allocation4], 0
    %s14 = scalar_lea.sflag [#allocation4], 1
    %15 = vsyncpa %s14, 0
    loop: start=0, step=1, limit=6
    $region2: #{tpu_custom_call.1} parent=1 // loop_pre_header
      _
    $region3: #{tpu_custom_call.1} parent=1 // loop_header
      %s17 = sphi 0, %s21
      %p18 = scmp.ge.s32.totalorder %s17, 6
      %s24 = sphi 0, %s36
      %s25 = sphi 0, %s32
      %s26 = sphi 0, %s24
      %s27 = sphi 0, %s25
      %s28 = sphi 0, %s26
      %s29 = sphi 0, %s27
      %s41 = sphi 0, %s43
      %s44 = sphi 0, %s41
      %s45 = sphi 0, %s44
      %s61 = sphi 0, %s45
      %s69 = sphi 0, %s71
      %s72 = sphi 0, %s69
      %s73 = sphi 0, %s72
      %s89 = sphi 0, %s73
      %s97 = sphi 0, %s99
      %s100 = sphi 0, %s97
      %s101 = sphi 0, %s100
      %s117 = sphi 0, %s101
    $region4: #{tpu_custom_call.1} parent=1 // loop_header_branch
      %20 = sbr.rel (%p18) target = $region8
    $region5: #{tpu_custom_call.1} parent=1 // loop_body
      %s22 = ssub.s32 %s17, 1
      %s23 = ssub.s32 %s17, 2
      %s30 = sadd.s32 1, %s25
      %p31 = scmp.ge.s32.totalorder %s30, 2
      %s32 = scalar_select %p31, 0, %s30
      %s33 = sadd.s32 1, %s24
      %s34 = scalar_select %p31, %s33, %s24
      %p35 = scmp.ge.s32.totalorder %s34, 2
      %s36 = scalar_select %p35, 0, %s34
      %s37 = ssub.s32 %s24, %s36
      %s38 = ssub.s32 %s25, %s32
      %s39 = sor.u32 %s37, %s38
      %p40 = scmp.eq.s32.totalorder %s39, 0
      %s42 = sadd.s32 %s41, 1
      %s43 = scalar_select %p40, %s41, %s42
      %p46 = pneg %p40
      %p47 = scmp.eq.s32.totalorder %s17, 3
      %p48 = por %p46, %p47
      %p49 = scmp.ne.s32.totalorder %s41, %s44
      %p50 = scmp.eq.s32.totalorder %s17, 0
      %p51 = por %p49, %p50
      %p52 = scmp.ne.s32.totalorder %s41, %s44
      %p53 = scmp.eq.s32.totalorder %s22, 3
      %p54 = por %p52, %p53
      %p55 = scmp.ne.s32.totalorder %s44, %s45
      %p56 = scmp.eq.s32.totalorder %s22, 0
      %p57 = por %p55, %p56
      %p58 = scmp.ne.s32.totalorder %s44, %s45
      %p59 = scmp.eq.s32.totalorder %s23, 3
      %p60 = por %p58, %p59
      %p62 = scmp.ne.s32.totalorder %s45, %s61
      %p63 = scmp.eq.s32.totalorder %s23, 0
      %p64 = por %p62, %p63
      %s65 = ssub.s32 %s24, %s36
      %s66 = ssub.s32 %s25, %s32
      %s67 = sor.u32 %s65, %s66
      %p68 = scmp.eq.s32.totalorder %s67, 0
      %s70 = sadd.s32 %s69, 1
      %s71 = scalar_select %p68, %s69, %s70
      %p74 = pneg %p68
      %p75 = scmp.eq.s32.totalorder %s17, 3
      %p76 = por %p74, %p75
      %p77 = scmp.ne.s32.totalorder %s69, %s72
      %p78 = scmp.eq.s32.totalorder %s17, 0
      %p79 = por %p77, %p78
      %p80 = scmp.ne.s32.totalorder %s69, %s72
      %p81 = scmp.eq.s32.totalorder %s22, 3
      %p82 = por %p80, %p81
      %p83 = scmp.ne.s32.totalorder %s72, %s73
      %p84 = scmp.eq.s32.totalorder %s22, 0
      %p85 = por %p83, %p84
      %p86 = scmp.ne.s32.totalorder %s72, %s73
      %p87 = scmp.eq.s32.totalorder %s23, 3
      %p88 = por %p86, %p87
      %p90 = scmp.ne.s32.totalorder %s73, %s89
      %p91 = scmp.eq.s32.totalorder %s23, 0
      %p92 = por %p90, %p91
      %s93 = ssub.s32 %s24, %s36
      %s94 = ssub.s32 %s25, %s32
      %s95 = sor.u32 %s93, %s94
      %p96 = scmp.eq.s32.totalorder %s95, 0
      %s98 = sadd.s32 %s97, 1
      %s99 = scalar_select %p96, %s97, %s98
      %p102 = pneg %p96
      %p103 = scmp.eq.s32.totalorder %s17, 3
      %p104 = por %p102, %p103
      %p105 = scmp.ne.s32.totalorder %s97, %s100
      %p106 = scmp.eq.s32.totalorder %s17, 0
      %p107 = por %p105, %p106
      %p108 = scmp.ne.s32.totalorder %s97, %s100
      %p109 = scmp.eq.s32.totalorder %s22, 3
      %p110 = por %p108, %p109
      %p111 = scmp.ne.s32.totalorder %s100, %s101
      %p112 = scmp.eq.s32.totalorder %s22, 0
      %p113 = por %p111, %p112
      %p114 = scmp.ne.s32.totalorder %s100, %s101
      %p115 = scmp.eq.s32.totalorder %s23, 3
      %p116 = por %p114, %p115
      %p118 = scmp.ne.s32.totalorder %s101, %s117
      %p119 = scmp.eq.s32.totalorder %s23, 0
      %p120 = por %p118, %p119
      %p121 = scmp.le.s32.totalorder 1, %s17
      %p122 = scmp.lt.s32.totalorder %s17, 5
      %p123 = pnand %p121, %p122
      %p124 = pneg %p123
      // Predicated region
      $region9: #{tpu_custom_call.1} parent=5 // pred_check
        _
      $region10: #{tpu_custom_call.1} parent=5 // pred_check_branch
        %126 = sbr.rel (%p123) target = $region12
      $region11: #{tpu_custom_call.1} parent=5 // pred_region
        %s127 = ssub.s32 %s17, 1
      $region12: #{tpu_custom_call.1} parent=5 // pred_fallthru
        _
      %p128 = scmp.lt.s32.totalorder %s17, 4
      // Predicated region
      $region13: #{tpu_custom_call.1} parent=5 // pred_check
        %p129 = pneg %p128
      $region14: #{tpu_custom_call.1} parent=5 // pred_check_branch
        %131 = sbr.rel (%p129) target = $region16
      $region15: #{tpu_custom_call.1} parent=5 // pred_region
        // Predicated region
        $region17: #{tpu_custom_call.1} parent=15 // pred_check
          %p132 = pneg %p51
        $region18: #{tpu_custom_call.1} parent=15 // pred_check_branch
          %134 = sbr.rel (%p132) target = $region20
        $region19: #{tpu_custom_call.1} parent=15 // pred_region
          %s135 = sand.u32 %s41, 1
          %s136 = scalar_lea.sflag [#allocation3], %s135
          %s137 = sand.u32 %s41, 1
          %s138 = smul.addr %s137, 32
          %s139 = scalar_lea.vmem [#allocation2], %s138
          %s141 = ssub.s32 512, 512
          %142 = vsyncadd %s136, %s141
          %s143 = smul.addr %s24, 8
          %s144 = sadd.s32 %s25, %s143
          %s145 = smul.addr %s144, 128
          %s146 = scalar_lea.hbm %s0, %s145
          %s147 = sshll.u32 %s139, 4
          %s148 = int_to_ptr.vmem [resolvable:$true] %s147
          %153 = dma.hbm_to_vmem [thread:$0]  %s146, 512, %s148, %s136, 256, 128, 8
        $region20: #{tpu_custom_call.1} parent=15 // pred_fallthru
          _
        // Predicated region
        $region21: #{tpu_custom_call.1} parent=15 // pred_check
          %p154 = pneg %p79
        $region22: #{tpu_custom_call.1} parent=15 // pred_check_branch
          %156 = sbr.rel (%p154) target = $region24
        $region23: #{tpu_custom_call.1} parent=15 // pred_region
          %s157 = sand.u32 %s69, 1
          %s158 = scalar_lea.sflag [#allocation6], %s157
          %s159 = sand.u32 %s69, 1
          %s160 = smul.addr %s159, 8
          %s161 = scalar_lea.vmem [#allocation5], %s160
          %s163 = ssub.s32 128, 128
          %164 = vsyncadd %s158, %s163
          %s165 = smul.addr %s24, 2
          %s166 = sadd.s32 %s25, %s165
          %s167 = smul.addr %s166, 128
          %s168 = scalar_lea.hbm %s1, %s167
          %s170 = sshll.u32 %s161, 4
          %s171 = int_to_ptr.vmem [resolvable:$true] %s170
          %173 = dma.hbm_to_vmem [thread:$0]  %s168, 128, %s171, %s158
        $region24: #{tpu_custom_call.1} parent=15 // pred_fallthru
          _
      $region16: #{tpu_custom_call.1} parent=5 // pred_fallthru
        _
      %p174 = scmp.le.s32.totalorder 1, %s17
      %p175 = scmp.lt.s32.totalorder %s17, 5
      %p176 = pnand %p174, %p175
      %p177 = pneg %p176
      // Predicated region
      $region25: #{tpu_custom_call.1} parent=5 // pred_check
        _
      $region26: #{tpu_custom_call.1} parent=5 // pred_check_branch
        %179 = sbr.rel (%p176) target = $region28
      $region27: #{tpu_custom_call.1} parent=5 // pred_region
        %s180 = ssub.s32 %s17, 1
        %s181 = sand.u32 %s44, 1
        %s182 = scalar_lea.sflag [#allocation3], %s181
        %s183 = sand.u32 %s44, 1
        %s184 = smul.addr %s183, 32
        %s185 = scalar_lea.vmem [#allocation2], %s184
        // Predicated region
        $region29: #{tpu_custom_call.1} parent=27 // pred_check
          %p186 = pneg %p57
        $region30: #{tpu_custom_call.1} parent=27 // pred_check_branch
          %188 = sbr.rel (%p186) target = $region32
        $region31: #{tpu_custom_call.1} parent=27 // pred_region
          %189 = dma.done %s182, 512
        $region32: #{tpu_custom_call.1} parent=27 // pred_fallthru
          _
        %s190 = sand.u32 %s72, 1
        %s191 = scalar_lea.sflag [#allocation6], %s190
        %s192 = sand.u32 %s72, 1
        %s193 = smul.addr %s192, 8
        %s194 = scalar_lea.vmem [#allocation5], %s193
        // Predicated region
        $region33: #{tpu_custom_call.1} parent=27 // pred_check
          %p195 = pneg %p85
        $region34: #{tpu_custom_call.1} parent=27 // pred_check_branch
          %197 = sbr.rel (%p195) target = $region36
        $region35: #{tpu_custom_call.1} parent=27 // pred_region
          %198 = dma.done %s191, 128
        $region36: #{tpu_custom_call.1} parent=27 // pred_fallthru
          _
        %s199 = sand.u32 %s44, 1
        %s200 = scalar_lea.sflag [#allocation3], %s199
        %s201 = sand.u32 %s44, 1
        %s202 = smul.addr %s201, 32
        %s203 = scalar_lea.vmem [#allocation2], %s202
        %p204 = pneg %p57
        %p205 = pneg %p54
        %s206 = sand.u32 %s72, 1
        %s207 = scalar_lea.sflag [#allocation6], %s206
        %s208 = sand.u32 %s72, 1
        %s209 = smul.addr %s208, 8
        %s210 = scalar_lea.vmem [#allocation5], %s209
        %p211 = pneg %p85
        %p212 = pneg %p82
        %p213 = pneg %p113
        %p214 = pneg %p110
        %s215 = sand.u32 %s100, 1
        %s216 = scalar_lea.sflag [#allocation4], %s215
        %s217 = sand.u32 %s100, 1
        %s218 = scalar_lea.vmem [#allocation7], %s217
        %v219 = vld [vmem:[%s194] sm:$0xff]
        %v220 = vld [vmem:[%s185] sm:$0xff]
        %vm221 = vcmp.eq.s32.totalorder %v219, 0
        %v222 = vsel %vm221, %v220, 0.0
        %s223 = scalar_lea.vmem %s185, 8 [#allocation2]
        %v224 = vld [vmem:[%s223] sm:$0xff]
        %v225 = vmax.f32 %v220, %v224
        %vm226 = vcmp.eq.s32.totalorder %v219, 1
        %v227 = vsel %vm226, %v224, %v222
        %s228 = scalar_lea.vmem %s185, 16 [#allocation2]
        %v229 = vld [vmem:[%s228] sm:$0xff]
        %v230 = vmax.f32 %v225, %v229
        %vm231 = vcmp.eq.s32.totalorder %v219, 2
        %v232 = vsel %vm231, %v229, %v227
        %s233 = scalar_lea.vmem %s185, 24 [#allocation2]
        %v234 = vld [vmem:[%s233] sm:$0xff]
        %v235 = vmax.f32 %v230, %v234
        %vm236 = vcmp.eq.s32.totalorder %v219, 3
        %v237 = vsel %vm236, %v234, %v232
        %v238 = vsub.f32 %v220, %v235
        %v239 = vmul.f32 %v238, 1.442695
        %v240 = vpow.pop %v239
        %v241 = vadd.f32 %v240, 0.0
        %v242 = vsub.f32 %v224, %v235
        %v243 = vmul.f32 %v242, 1.442695
        %v244 = vpow.pop %v243
        %v245 = vadd.f32 %v241, %v244
        %v246 = vsub.f32 %v229, %v235
        %v247 = vmul.f32 %v246, 1.442695
        %v248 = vpow.pop %v247
        %v249 = vadd.f32 %v245, %v248
        %v250 = vsub.f32 %v234, %v235
        %v251 = vmul.f32 %v250, 1.442695
        %v252 = vpow.pop %v251
        %v253 = vadd.f32 %v249, %v252
        %v254 = vlog2.pop %v253
        %v255 = vmul.f32 %v254, 0.6931472
        %v256 = vadd.f32 %v235, %v255
        %v257 = vsub.f32 %v256, %v237
        %vm258 = vcmp.ne.s32.totalorder %v219, 255
        %v259 = vsel %vm258, %v257, 0.0
        %vm260 = vcmask 130048
        %v261 = vsel %vm260, %v259, -inf
        %262 = vmax.xlane.f32.xlu0 %v261
        %v263 = vpop.xlane.xlu0 %262
        %v264 = vadd.f32 %v263, 0.0
        %vm265 = vcmask 7168
        %v266 = vsel %vm265, %v264, 0.0
        %267 = vadd.xlane.f32.xlu0 %v266
        %v268 = vpop.xlane.xlu0 %267
        %v269 = vrot.slane %v268, 4
        %v270 = vadd.f32 %v268, %v269
        %v271 = vrot.slane %v270, 2
        %v272 = vadd.f32 %v270, %v271
        %v273 = vrot.slane %v272, 1
        %v274 = vadd.f32 %v272, %v273
        %s275 = vtos %v274
        %v276 = vstv %s275
        %277 = vst [vmem:[%s218] sm:$0x1] %v276
        %s278 = sand.u32 %s100, 1
        %s279 = scalar_lea.sflag [#allocation4], %s278
        %s280 = sand.u32 %s100, 1
        %s281 = scalar_lea.vmem [#allocation7], %s280
        // Predicated region
        $region37: #{tpu_custom_call.1} parent=27 // pred_check
          %p282 = pneg %p110
        $region38: #{tpu_custom_call.1} parent=27 // pred_check_branch
          %284 = sbr.rel (%p282) target = $region40
        $region39: #{tpu_custom_call.1} parent=27 // pred_region
          %s286 = ssub.s32 16, 16
          %287 = vsyncadd %s279, %s286
          %s288 = smul.addr %s26, 2
          %s289 = sadd.s32 %s27, %s288
          %s290 = smul.addr %s289, 16
          %s291 = scalar_lea.hbm %s2, %s290
          %s293 = sshll.u32 %s281, 4
          %s294 = int_to_ptr.vmem [resolvable:$true] %s293
          %296 = dma.vmem_to_hbm [thread:$0]  %s294, 16, %s291, %s279
        $region40: #{tpu_custom_call.1} parent=27 // pred_fallthru
          _
      $region28: #{tpu_custom_call.1} parent=5 // pred_fallthru
        _
      %p297 = scmp.le.s32.totalorder 2, %s17
      // Predicated region
      $region41: #{tpu_custom_call.1} parent=5 // pred_check
        %p298 = pneg %p297
      $region42: #{tpu_custom_call.1} parent=5 // pred_check_branch
        %300 = sbr.rel (%p298) target = $region44
      $region43: #{tpu_custom_call.1} parent=5 // pred_region
        %s301 = ssub.s32 %s17, 2
        // Predicated region
        $region45: #{tpu_custom_call.1} parent=43 // pred_check
          %p302 = pneg %p116
        $region46: #{tpu_custom_call.1} parent=43 // pred_check_branch
          %304 = sbr.rel (%p302) target = $region48
        $region47: #{tpu_custom_call.1} parent=43 // pred_region
          %s305 = sand.u32 %s101, 1
          %s306 = scalar_lea.sflag [#allocation4], %s305
          %s307 = sand.u32 %s101, 1
          %s308 = scalar_lea.vmem [#allocation7], %s307
          %309 = dma.done %s306, 16
        $region48: #{tpu_custom_call.1} parent=43 // pred_fallthru
          _
      $region44: #{tpu_custom_call.1} parent=5 // pred_fallthru
        _
    $region6: #{tpu_custom_call.1} parent=1 // loop_footer
      %s21 = sadd.s32 1, %s17
    $region7: #{tpu_custom_call.1} parent=1 // loop_footer_branch
      %16 = sbr.rel target = $region3
    $region8: #{tpu_custom_call.1} parent=1 // loop_exit
      _
    %310 = vsyncpa [#allocation3], 1
    %s311 = scalar_lea.sflag [#allocation3], 1
    %312 = vsyncpa %s311, 1
    %313 = vsyncpa [#allocation6], 1
    %s314 = scalar_lea.sflag [#allocation6], 1
    %315 = vsyncpa %s314, 1
    %316 = vsyncpa [#allocation4], 1
    %s317 = scalar_lea.sflag [#allocation4], 1
    %318 = vsyncpa %s317, 1

</llo_original>
